<compile_context>
chip_gen: v7x
topology: tpu7x:2x2x1
jax: 0.10.0
libtpu: 0.0.40
codegen_flags: <defaults>
</compile_context>

<pallas_src>
import jax
import jax.numpy as jnp
from jax import lax
from jax.experimental import pallas as pl
from jax.experimental.pallas import tpu as pltpu


def _relu6(x):
    return jnp.clip(x, 0.0, 6.0)


def _round_up(a, m):
    return ((a + m - 1) // m) * m


def _cdiv(a, b):
    return (a + b - 1) // b


def _sublane_rows(itemsize):
    # f32 -> 8, bf16 -> 16, int8/fp8 -> 32 rows per (sublane, lane) tile.
    return max(8, 32 // int(itemsize))


def _padded_vmem_bytes(shape, itemsize):
    """Conservative per-buffer VMEM footprint after (sublane, 128) tiling."""
    shape = tuple(int(d) for d in shape)
    if len(shape) == 0:
        return 8 * 128 * itemsize
    if len(shape) == 1:
        return _round_up(shape[0], 128) * 8 * itemsize
    lead = 1
    for d in shape[:-2]:
        lead *= d
    sub = _sublane_rows(itemsize)
    return lead * _round_up(shape[-2], sub) * _round_up(shape[-1], 128) * itemsize


def _vmem_capacity_bytes():
    """Physical VMEM of the current TPU; conservative 64 MiB fallback."""
    try:
        info = pltpu.get_tpu_info()
        cap = getattr(info, "vmem_capacity_bytes", None)
        if cap:
            return int(cap)
    except Exception:
        pass
    return 64 << 20  # v7x-sized fallback


def _make_head_kernel(*, S, ts, NC, NC_pad, inv_s, need_mask, multi_step):
    """Static config closed over at trace time."""
    n_full = ts // 128
    rem = ts - n_full * 128
    assert (not multi_step) or rem == 0  # multi-step blocks are 128-multiples

    def head_kernel(x_ref,
                    w1_ref, b1_ref, w2_ref, b2_ref,
                    w3_ref, b3_ref, w4_ref, b4_ref,
                    o_ref, acc_ref):
        s = pl.program_id(1)
        base = s * ts  # first global sequence index covered by this block

        def chunk(lo, width):
            # (tb, C, width) slab; masked against the true sequence length so
            # a ragged final block contributes exactly zero (no wrapper pad).
            c = x_ref[:, :, lo:lo + width]
            if need_mask:
                idx = lax.broadcasted_iota(jnp.int32, c.shape, 2) + (base + lo)
                c = jnp.where(idx < S, c, jnp.zeros_like(c))
            return c.astype(jnp.float32)

        if multi_step:
            @pl.when(s == 0)
            def _():
                acc_ref[...] = jnp.zeros_like(acc_ref)

            # Hot loop: elementwise (VPU) folds into a lane-dense f32
            # accumulator — no cross-lane reduce, no partial-lane stores here.
            upd = acc_ref[...]
            for j in range(n_full):
                upd = upd + chunk(j * 128, 128)
            acc_ref[...] = upd

        def pooled_mean():
            if multi_step:
                # One cross-lane reduce per batch tile; fold the mean's 1/S here.
                return jnp.sum(acc_ref[...], axis=-1) * inv_s
            # Single sequence block: fold in values, reduce once.
            total = None
            if n_full > 0:
                v = chunk(0, 128)
                for j in range(1, n_full):
                    v = v + chunk(j * 128, 128)
                total = jnp.sum(v, axis=-1)
            if rem > 0:
                r = jnp.sum(chunk(n_full * 128, rem), axis=-1)
                total = r if total is None else total + r
            return total * inv_s

        @pl.when(s == pl.num_programs(1) - 1)
        def _():
            pooled = pooled_mean()                                   # (tb, C) f32

            h = _relu6(jnp.dot(pooled, w1_ref[...],
                               preferred_element_type=jnp.float32) + b1_ref[...])
            h = _relu6(jnp.dot(h, w2_ref[...],
                               preferred_element_type=jnp.float32) + b2_ref[...])
            h = _relu6(jnp.dot(h, w3_ref[...],
                               preferred_element_type=jnp.float32) + b3_ref[...])
            logits = jnp.dot(h, w4_ref[...],
                             preferred_element_type=jnp.float32) + b4_ref[...]

            if NC_pad != NC:
                # Mask padded classes on the f32 logits (dtype-safe): their
                # exp() underflows to 0 and never perturbs the denominator.
                cls = lax.broadcasted_iota(jnp.int32, logits.shape, 1)
                logits = jnp.where(cls < NC, logits, -1e30)

            m = jnp.max(logits, axis=-1, keepdims=True)
            e = jnp.exp(logits - m)
            denom = jnp.sum(e, axis=-1, keepdims=True)
            o_ref[...] = (e / denom).astype(o_ref.dtype)             # exact divide

    return head_kernel


def classification_head_simple(x, params, *, x_budget_bytes=None):
    """x: (B, C, S). params: weights stored (fan_in, fan_out), biases (1, fan_out)."""
    B, C, S = (int(d) for d in x.shape)
    NC = int(params["w4"].shape[1])
    NC_pad = _round_up(NC, 128)                       # lane-dense output slab
    itemsize = x.dtype.itemsize
    sub = _sublane_rows(itemsize)
    C_rows = _round_up(C, sub)                        # x-slab channel rows (input dtype)
    C_rows_f32 = _round_up(C, 8)                      # f32 accumulator channel rows

    # ---- generation-aware budgets -------------------------------------------
    phys_vmem = _vmem_capacity_bytes()
    if phys_vmem >= (96 << 20):                       # v5e / v6e: 128 MiB VMEM
        limit_cap = 96 << 20
        if x_budget_bytes is None:
            x_budget_bytes = 64 << 20
    else:                                             # v7x: 64 MiB VMEM
        limit_cap = 44 << 20
        if x_budget_bytes is None:
            x_budget_bytes = 20 << 20

    # ---- batch tile ----------------------------------------------------------
    # >= 2 blocks when B > 8 (v7x dual-TC sharding of the "parallel" axis),
    # multiple of 8 sublanes, bounded so a double-buffered (tb, C, 128) x slab
    # plus the f32 lane accumulator still fits the x budget.  Ragged tails are
    # handled by Pallas partial blocks — no wrapper jnp.pad of x.
    if B <= 8:
        tb = B
    else:
        nb_target = max(2, _cdiv(B, 256))
        tb = min(256, _round_up(_cdiv(B, nb_target), 8))
        per_row_128 = 2 * C_rows * 128 * itemsize + C_rows_f32 * 128 * 4
        tb_max = max(8, (x_budget_bytes // per_row_128) // 8 * 8)
        tb = max(8, min(tb, tb_max))
    nb = _cdiv(B, tb)

    # ---- sequence chunk ------------------------------------------------------
    acc_bytes = _round_up(tb, 8) * C_rows_f32 * 128 * 4
    per_seq_elem = 2 * tb * C_rows * itemsize         # double-buffered x stream
    max_ts = max(1, (x_budget_bytes - acc_bytes) // per_seq_elem)
    if max_ts >= S:
        ts = S                                        # single block (no mask needed)
    else:
        ts = max(128, (max_ts // 128) * 128)          # 128-lane multiples in the hot loop
    ns = _cdiv(S, ts)
    multi_step = ns > 1
    need_mask = (S % ts) != 0                         # ragged final sequence block

    # ---- pad ONLY the tiny final-layer params to a lane-dense class slab ----
    w4, b4 = params["w4"], params["b4"]
    if NC_pad != NC:
        w4 = jnp.pad(w4, ((0, 0), (0, NC_pad - NC)))
        b4 = jnp.pad(b4, ((0, 0), (0, NC_pad - NC)))  # padded logits masked in-kernel

    weights = (params["w1"], params["b1"],
               params["w2"], params["b2"],
               params["w3"], params["b3"],
               w4, b4)

    grid = (nb, ns)

    def _const_spec(a):
        # Full-array block, constant block index -> DMA'd once, stays resident.
        return pl.BlockSpec(a.shape, lambda i, s: (0, 0))

    in_specs = [pl.BlockSpec((tb, C, ts), lambda i, s: (i, 0, s))]
    in_specs += [_const_spec(a) for a in weights]
    out_spec = pl.BlockSpec((tb, NC_pad), lambda i, s: (i, 0))

    acc_shape = (tb, C, 128) if multi_step else (8, 128)   # dummy when single step

    # ---- scoped-VMEM limit (dtype-aware footprint, generation-aware cap) ----
    need = 2 * tb * C_rows * _round_up(ts, 128) * itemsize          # x (double buf)
    for a in weights:
        need += 2 * _padded_vmem_bytes(a.shape, a.dtype.itemsize)   # resident weights
    need += 2 * _round_up(tb, 8) * NC_pad * 4                       # output block
    need += _padded_vmem_bytes(acc_shape, 4) + 2 * acc_bytes        # acc + fold temps
    vmem_limit = int(min(limit_cap, max(32 << 20, int(need * 1.4) + (6 << 20))))

    # ---- advisory cost estimate (helps XLA overlap neighbouring ops) --------
    fc_flops = 2 * (C * 2 * C + 2 * C * C + C * (C // 2) + (C // 2) * NC)
    cost = pl.CostEstimate(
        flops=int(B * (C * S + fc_flops)),
        transcendentals=int(B * NC_pad),
        bytes_accessed=int(B * C * S * itemsize
                           + sum(int(a.size) * a.dtype.itemsize for a in weights)
                           + B * NC_pad * 4),
    )

    kernel = _make_head_kernel(S=S, ts=ts, NC=NC, NC_pad=NC_pad,
                               inv_s=1.0 / S, need_mask=need_mask,
                               multi_step=multi_step)

    out_padded = pl.pallas_call(
        kernel,
        out_shape=jax.ShapeDtypeStruct((B, NC_pad), jnp.float32),
        grid_spec=pltpu.PrefetchScalarGridSpec(
            num_scalar_prefetch=0,
            grid=grid,
            in_specs=in_specs,
            out_specs=out_spec,
            scratch_shapes=[pltpu.VMEM(acc_shape, jnp.float32)],
        ),
        compiler_params=pltpu.CompilerParams(
            dimension_semantics=("parallel", "arbitrary"),
            vmem_limit_bytes=vmem_limit,
        ),
        cost_estimate=cost,
    )(x, *weights)

    return out_padded[:, :NC]


def make_params(key, in_channels, num_classes, dtype=jnp.float32):
    """Deterministic synthetic parameters. Weights stored as (fan_in, fan_out)."""
    ks = jax.random.split(key, 8)
    c = in_channels
    dims = [(c, 2 * c), (2 * c, c), (c, c // 2), (c // 2, num_classes)]
    params = {}
    for i, (fi, fo) in enumerate(dims, start=1):
        scale = 1.0 / jnp.sqrt(jnp.float32(fi))
        params[f"w{i}"] = (jax.random.uniform(ks[2 * (i - 1)], (fi, fo),
                                              minval=-1.0, maxval=1.0) * scale).astype(dtype)
        params[f"b{i}"] = (jax.random.uniform(ks[2 * (i - 1) + 1], (1, fo),
                                              minval=-1.0, maxval=1.0) * scale).astype(dtype)
    return params


def reference_forward(x, params):
    """Pure-JAX reference for correctness checking."""
    h = jnp.mean(x, axis=-1)
    h = _relu6(h @ params["w1"] + params["b1"])
    h = _relu6(h @ params["w2"] + params["b2"])
    h = _relu6(h @ params["w3"] + params["b3"])
    logits = h @ params["w4"] + params["b4"]
    return jax.nn.softmax(logits, axis=-1)


if __name__ == "__main__":
    B, C, S = 4, 32, 16          # batch, in_channels, sequence length
    NUM_CLASSES = 8

    key = jax.random.PRNGKey(0)
    kx, kp = jax.random.split(key)
    x = jax.random.normal(kx, (B, C, S), dtype=jnp.float32)
    params = make_params(kp, C, NUM_CLASSES)

    out = classification_head_simple(x, params)
    out = jax.block_until_ready(out)

    ref = reference_forward(x, params)
    assert out.shape == (B, NUM_CLASSES), out.shape
    max_err = float(jnp.max(jnp.abs(out - ref)))
    # Tightened vs. v1 (exact softmax divide now; remaining diff is MXU f32
    # matmul precision only).
    assert jnp.allclose(out, ref, atol=2e-3, rtol=2e-3), f"mismatch, max_err={max_err}"
    assert bool(jnp.allclose(jnp.sum(out, axis=-1), 1.0, atol=1e-3))

    print("KERNEL_OK")
</pallas_src>

<mosaic_0001>
module attributes {stable_mosaic.version = 11 : i64} {
  func.func @head_kernel(%arg0: i32, %arg1: i32, %arg2: memref<4x32x16xf32, #tpu.memory_space<vmem>>, %arg3: memref<32x64xf32, #tpu.memory_space<vmem>>, %arg4: memref<1x64xf32, #tpu.memory_space<vmem>>, %arg5: memref<64x32xf32, #tpu.memory_space<vmem>>, %arg6: memref<1x32xf32, #tpu.memory_space<vmem>>, %arg7: memref<32x16xf32, #tpu.memory_space<vmem>>, %arg8: memref<1x16xf32, #tpu.memory_space<vmem>>, %arg9: memref<16x128xf32, #tpu.memory_space<vmem>>, %arg10: memref<1x128xf32, #tpu.memory_space<vmem>>, %arg11: memref<4x128xf32, #tpu.memory_space<vmem>>, %arg12: memref<8x128xf32, #tpu.memory_space<vmem>>) attributes {dimension_semantics = [#tpu.dimension_semantics<parallel>, #tpu.dimension_semantics<arbitrary>], iteration_bounds = array<i64: 1, 1>, scalar_prefetch = 0 : i64, scratch_operands = 1 : i64, tpu.core_type = #tpu.core_type<tc>, window_params = [{transform_indices = @transform_0, window_bounds = array<i64: 4, 32, 16>}, {pipeline_mode = #tpu.pipeline_mode<synchronous>, transform_indices = @transform_1, window_bounds = array<i64: 32, 64>}, {pipeline_mode = #tpu.pipeline_mode<synchronous>, transform_indices = @transform_2, window_bounds = array<i64: 1, 64>}, {pipeline_mode = #tpu.pipeline_mode<synchronous>, transform_indices = @transform_3, window_bounds = array<i64: 64, 32>}, {pipeline_mode = #tpu.pipeline_mode<synchronous>, transform_indices = @transform_4, window_bounds = array<i64: 1, 32>}, {pipeline_mode = #tpu.pipeline_mode<synchronous>, transform_indices = @transform_5, window_bounds = array<i64: 32, 16>}, {pipeline_mode = #tpu.pipeline_mode<synchronous>, transform_indices = @transform_6, window_bounds = array<i64: 1, 16>}, {pipeline_mode = #tpu.pipeline_mode<synchronous>, transform_indices = @transform_7, window_bounds = array<i64: 16, 128>}, {pipeline_mode = #tpu.pipeline_mode<synchronous>, transform_indices = @transform_8, window_bounds = array<i64: 1, 128>}, {transform_indices = @transform_9, window_bounds = array<i64: 4, 128>}]} {
    %c0_i32 = arith.constant 0 : i32
    %0 = arith.cmpi eq, %arg1, %c0_i32 : i32
    %1 = arith.extui %0 : i1 to i32
    %c0_i32_0 = arith.constant 0 : i32
    %2 = arith.cmpi ne, %1, %c0_i32_0 : i32
    scf.if %2 {
      %c0 = arith.constant 0 : index
      %c0_1 = arith.constant 0 : index
      %c0_2 = arith.constant 0 : index
      %3 = vector.load %arg2[%c0, %c0_1, %c0_2] : memref<4x32x16xf32, #tpu.memory_space<vmem>>, vector<4x32x16xf32>
      %cst = arith.constant dense<0.000000e+00> : vector<4x32xf32>
      %4 = vector.multi_reduction <add>, %3, %cst [2] : vector<4x32x16xf32> to vector<4x32xf32>
      %cst_3 = arith.constant 6.250000e-02 : f32
      %5 = vector.broadcast %cst_3 : f32 to vector<4x32xf32>
      %6 = arith.mulf %4, %5 : vector<4x32xf32>
      %c0_4 = arith.constant 0 : index
      %c0_5 = arith.constant 0 : index
      %7 = vector.load %arg3[%c0_4, %c0_5] : memref<32x64xf32, #tpu.memory_space<vmem>>, vector<32x64xf32>
      %cst_6 = arith.constant dense<0.000000e+00> : vector<4x64xf32>
      %8 = tpu.matmul %6, %7, %cst_6 {dimension_numbers = #tpu.dot_dimension_numbers<[1], [0], [0], [1], [0, 0, 1, 1], [], []>} : vector<4x32xf32>, vector<32x64xf32>, vector<4x64xf32> -> vector<4x64xf32>
      %c0_7 = arith.constant 0 : index
      %c0_8 = arith.constant 0 : index
      %9 = vector.load %arg4[%c0_7, %c0_8] : memref<1x64xf32, #tpu.memory_space<vmem>>, vector<1x64xf32>
      %10 = vector.broadcast %9 : vector<1x64xf32> to vector<4x64xf32>
      %11 = arith.addf %8, %10 : vector<4x64xf32>
      %cst_9 = arith.constant 0.000000e+00 : f32
      %cst_10 = arith.constant 6.000000e+00 : f32
      %12 = vector.broadcast %cst_9 : f32 to vector<4x64xf32>
      %13 = arith.maximumf %12, %11 : vector<4x64xf32>
      %14 = vector.broadcast %cst_10 : f32 to vector<4x64xf32>
      %15 = arith.minimumf %14, %13 : vector<4x64xf32>
      %c0_11 = arith.constant 0 : index
      %c0_12 = arith.constant 0 : index
      %16 = vector.load %arg5[%c0_11, %c0_12] : memref<64x32xf32, #tpu.memory_space<vmem>>, vector<64x32xf32>
      %cst_13 = arith.constant dense<0.000000e+00> : vector<4x32xf32>
      %17 = tpu.matmul %15, %16, %cst_13 {dimension_numbers = #tpu.dot_dimension_numbers<[1], [0], [0], [1], [0, 0, 1, 1], [], []>} : vector<4x64xf32>, vector<64x32xf32>, vector<4x32xf32> -> vector<4x32xf32>
      %c0_14 = arith.constant 0 : index
      %c0_15 = arith.constant 0 : index
      %18 = vector.load %arg6[%c0_14, %c0_15] : memref<1x32xf32, #tpu.memory_space<vmem>>, vector<1x32xf32>
      %19 = vector.broadcast %18 : vector<1x32xf32> to vector<4x32xf32>
      %20 = arith.addf %17, %19 : vector<4x32xf32>
      %cst_16 = arith.constant 0.000000e+00 : f32
      %cst_17 = arith.constant 6.000000e+00 : f32
      %21 = vector.broadcast %cst_16 : f32 to vector<4x32xf32>
      %22 = arith.maximumf %21, %20 : vector<4x32xf32>
      %23 = vector.broadcast %cst_17 : f32 to vector<4x32xf32>
      %24 = arith.minimumf %23, %22 : vector<4x32xf32>
      %c0_18 = arith.constant 0 : index
      %c0_19 = arith.constant 0 : index
      %25 = vector.load %arg7[%c0_18, %c0_19] : memref<32x16xf32, #tpu.memory_space<vmem>>, vector<32x16xf32>
      %cst_20 = arith.constant dense<0.000000e+00> : vector<4x16xf32>
      %26 = tpu.matmul %24, %25, %cst_20 {dimension_numbers = #tpu.dot_dimension_numbers<[1], [0], [0], [1], [0, 0, 1, 1], [], []>} : vector<4x32xf32>, vector<32x16xf32>, vector<4x16xf32> -> vector<4x16xf32>
      %c0_21 = arith.constant 0 : index
      %c0_22 = arith.constant 0 : index
      %27 = vector.load %arg8[%c0_21, %c0_22] : memref<1x16xf32, #tpu.memory_space<vmem>>, vector<1x16xf32>
      %28 = vector.broadcast %27 : vector<1x16xf32> to vector<4x16xf32>
      %29 = arith.addf %26, %28 : vector<4x16xf32>
      %cst_23 = arith.constant 0.000000e+00 : f32
      %cst_24 = arith.constant 6.000000e+00 : f32
      %30 = vector.broadcast %cst_23 : f32 to vector<4x16xf32>
      %31 = arith.maximumf %30, %29 : vector<4x16xf32>
      %32 = vector.broadcast %cst_24 : f32 to vector<4x16xf32>
      %33 = arith.minimumf %32, %31 : vector<4x16xf32>
      %c0_25 = arith.constant 0 : index
      %c0_26 = arith.constant 0 : index
      %34 = vector.load %arg9[%c0_25, %c0_26] : memref<16x128xf32, #tpu.memory_space<vmem>>, vector<16x128xf32>
      %cst_27 = arith.constant dense<0.000000e+00> : vector<4x128xf32>
      %35 = tpu.matmul %33, %34, %cst_27 {dimension_numbers = #tpu.dot_dimension_numbers<[1], [0], [0], [1], [0, 0, 1, 1], [], []>} : vector<4x16xf32>, vector<16x128xf32>, vector<4x128xf32> -> vector<4x128xf32>
      %c0_28 = arith.constant 0 : index
      %c0_29 = arith.constant 0 : index
      %36 = vector.load %arg10[%c0_28, %c0_29] : memref<1x128xf32, #tpu.memory_space<vmem>>, vector<1x128xf32>
      %37 = vector.broadcast %36 : vector<1x128xf32> to vector<4x128xf32>
      %38 = arith.addf %35, %37 : vector<4x128xf32>
      %39 = tpu.iota {dimensions = array<i32: 1>} : vector<4x128xi32>
      %c8_i32 = arith.constant 8 : i32
      %40 = vector.broadcast %c8_i32 : i32 to vector<4x128xi32>
      %41 = arith.cmpi slt, %39, %40 : vector<4x128xi32>
      %cst_30 = arith.constant -1.000000e+30 : f32
      %42 = vector.broadcast %cst_30 : f32 to vector<4x128xf32>
      %43 = arith.select %41, %38, %42 : vector<4x128xi1>, vector<4x128xf32>
      %cst_31 = arith.constant dense<0xFF800000> : vector<4xf32>
      %44 = vector.multi_reduction <maximumf>, %43, %cst_31 [1] : vector<4x128xf32> to vector<4xf32>
      %45 = vector.shape_cast %44 : vector<4xf32> to vector<4x1xf32>
      %46 = vector.broadcast %45 : vector<4x1xf32> to vector<4x128xf32>
      %47 = arith.subf %43, %46 : vector<4x128xf32>
      %48 = math.exp %47 : vector<4x128xf32>
      %cst_32 = arith.constant dense<0.000000e+00> : vector<4xf32>
      %49 = vector.multi_reduction <add>, %48, %cst_32 [1] : vector<4x128xf32> to vector<4xf32>
      %50 = vector.shape_cast %49 : vector<4xf32> to vector<4x1xf32>
      %51 = vector.broadcast %50 : vector<4x1xf32> to vector<4x128xf32>
      %52 = arith.divf %48, %51 : vector<4x128xf32>
      %c0_33 = arith.constant 0 : index
      %c0_34 = arith.constant 0 : index
      %53 = vector.load %arg11[%c0_33, %c0_34] : memref<4x128xf32, #tpu.memory_space<vmem>>, vector<4x128xf32>
      tpu.vector_store %arg11[%c0_33, %c0_34], %52 {strides = array<i32>} : memref<4x128xf32, #tpu.memory_space<vmem>>, vector<4x128xf32>,
    } else {
    }
    return
  }
  func.func @transform_0(%arg0: i32, %arg1: i32) -> (i32, i32, i32) {
    %c0_i32 = arith.constant 0 : i32
    %c0_i32_0 = arith.constant 0 : i32
    return %arg0, %c0_i32, %arg1 : i32, i32, i32
  }
  func.func @transform_1(%arg0: i32, %arg1: i32) -> (i32, i32) {
    %c0_i32 = arith.constant 0 : i32
    %c0_i32_0 = arith.constant 0 : i32
    %c0_i32_1 = arith.constant 0 : i32
    return %c0_i32, %c0_i32_0 : i32, i32
  }
  func.func @transform_2(%arg0: i32, %arg1: i32) -> (i32, i32) {
    %c0_i32 = arith.constant 0 : i32
    %c0_i32_0 = arith.constant 0 : i32
    %c0_i32_1 = arith.constant 0 : i32
    return %c0_i32, %c0_i32_0 : i32, i32
  }
  func.func @transform_3(%arg0: i32, %arg1: i32) -> (i32, i32) {
    %c0_i32 = arith.constant 0 : i32
    %c0_i32_0 = arith.constant 0 : i32
    %c0_i32_1 = arith.constant 0 : i32
    return %c0_i32, %c0_i32_0 : i32, i32
  }
  func.func @transform_4(%arg0: i32, %arg1: i32) -> (i32, i32) {
    %c0_i32 = arith.constant 0 : i32
    %c0_i32_0 = arith.constant 0 : i32
    %c0_i32_1 = arith.constant 0 : i32
    return %c0_i32, %c0_i32_0 : i32, i32
  }
  func.func @transform_5(%arg0: i32, %arg1: i32) -> (i32, i32) {
    %c0_i32 = arith.constant 0 : i32
    %c0_i32_0 = arith.constant 0 : i32
    %c0_i32_1 = arith.constant 0 : i32
    return %c0_i32, %c0_i32_0 : i32, i32
  }
  func.func @transform_6(%arg0: i32, %arg1: i32) -> (i32, i32) {
    %c0_i32 = arith.constant 0 : i32
    %c0_i32_0 = arith.constant 0 : i32
    %c0_i32_1 = arith.constant 0 : i32
    return %c0_i32, %c0_i32_0 : i32, i32
  }
  func.func @transform_7(%arg0: i32, %arg1: i32) -> (i32, i32) {
    %c0_i32 = arith.constant 0 : i32
    %c0_i32_0 = arith.constant 0 : i32
    %c0_i32_1 = arith.constant 0 : i32
    return %c0_i32, %c0_i32_0 : i32, i32
  }
  func.func @transform_8(%arg0: i32, %arg1: i32) -> (i32, i32) {
    %c0_i32 = arith.constant 0 : i32
    %c0_i32_0 = arith.constant 0 : i32
    %c0_i32_1 = arith.constant 0 : i32
    return %c0_i32, %c0_i32_0 : i32, i32
  }
  func.func @transform_9(%arg0: i32, %arg1: i32) -> (i32, i32) {
    %c0_i32 = arith.constant 0 : i32
    %c0_i32_0 = arith.constant 0 : i32
    return %arg0, %c0_i32 : i32, i32
  }
}

</mosaic_0001>

<llo_original>
// kernel: tpu_custom_call.1
$region0: #{tpu_custom_call.1}
  #allocation0 [shape = 'u32[]', space=smem, size = 0x4, offset = 0x4, fixed_abs, tag = 'smem constant byte address 0x4 - core index']
  #allocation1 [shape = 'u32[144,128]{1,0:T(1,128)}', space=vmem, size = 0x12000, scoped, tag = 'internal scratch']
  #allocation2 [shape = 'f32[8,128]{1,0:T(8,128)}', space=vmem, size = 0x1000, scoped, tag = 'scratch operand']
  %s0 = inlined_call_operand.vmem [shape: f32[4,32,16], index: 0, kind: input, shape index: {}]
  %s1 = inlined_call_operand.vmem [shape: f32[32,64], index: 1, kind: input, shape index: {}]
  %s2 = inlined_call_operand.vmem [shape: f32[1,64], index: 2, kind: input, shape index: {}]
  %s3 = inlined_call_operand.vmem [shape: f32[64,32], index: 3, kind: input, shape index: {}]
  %s4 = inlined_call_operand.vmem [shape: f32[1,32], index: 4, kind: input, shape index: {}]
  %s5 = inlined_call_operand.vmem [shape: f32[32,16], index: 5, kind: input, shape index: {}]
  %s6 = inlined_call_operand.vmem [shape: f32[1,16], index: 6, kind: input, shape index: {}]
  %s7 = inlined_call_operand.vmem [shape: f32[16,128], index: 7, kind: input, shape index: {}]
  %s8 = inlined_call_operand.vmem [shape: f32[1,128], index: 8, kind: input, shape index: {}]
  %s9 = inlined_call_operand.hbm [shape: f32[4,128], index: 9, kind: output, shape index: {}]
  %s10 = sld [smem:[#allocation0]]
  $region50: #{tpu_custom_call.1} parent=0
    _
  %s12 = ssub.s32 1, %s10
  %s13 = scalar_select 0, %s12, %s10
  $region1: #{tpu_custom_call.1} parent=0
    #allocation3 [shape = 'u8[2048]{0}', space=vmem, size = 0x800, scoped, tag = 'output window, operand 0, single buffered']
    #allocation4 [shape = 's32[1]{0}', space=sflag, size = 0x4, scoped, tag = 'scoped memory for tpu_custom_call.1']
    %14 = vsyncpa [#allocation4], 0
    // Predicated region
    $region2: #{tpu_custom_call.1} parent=1 // pred_check
      _
    $region3: #{tpu_custom_call.1} parent=1 // pred_check_branch
      %16 = sbr.rel (0) target = $region5
    $region4: #{tpu_custom_call.1} parent=1 // pred_region
      _
    $region5: #{tpu_custom_call.1} parent=1 // pred_fallthru
      _
    // Predicated region
    $region6: #{tpu_custom_call.1} parent=1 // pred_check
      _
    $region7: #{tpu_custom_call.1} parent=1 // pred_check_branch
      %18 = sbr.rel (0) target = $region9
    $region8: #{tpu_custom_call.1} parent=1 // pred_region
      _
    $region9: #{tpu_custom_call.1} parent=1 // pred_fallthru
      _
    // Predicated region
    $region10: #{tpu_custom_call.1} parent=1 // pred_check
      _
    $region11: #{tpu_custom_call.1} parent=1 // pred_check_branch
      %20 = sbr.rel (0) target = $region13
    $region12: #{tpu_custom_call.1} parent=1 // pred_region
      _
    $region13: #{tpu_custom_call.1} parent=1 // pred_fallthru
      _
    // Predicated region
    $region14: #{tpu_custom_call.1} parent=1 // pred_check
      _
    $region15: #{tpu_custom_call.1} parent=1 // pred_check_branch
      %22 = sbr.rel (0) target = $region17
    $region16: #{tpu_custom_call.1} parent=1 // pred_region
      _
    $region17: #{tpu_custom_call.1} parent=1 // pred_fallthru
      _
    // Predicated region
    $region18: #{tpu_custom_call.1} parent=1 // pred_check
      _
    $region19: #{tpu_custom_call.1} parent=1 // pred_check_branch
      %24 = sbr.rel (0) target = $region21
    $region20: #{tpu_custom_call.1} parent=1 // pred_region
      _
    $region21: #{tpu_custom_call.1} parent=1 // pred_fallthru
      _
    // Predicated region
    $region22: #{tpu_custom_call.1} parent=1 // pred_check
      _
    $region23: #{tpu_custom_call.1} parent=1 // pred_check_branch
      %26 = sbr.rel (0) target = $region25
    $region24: #{tpu_custom_call.1} parent=1 // pred_region
      _
    $region25: #{tpu_custom_call.1} parent=1 // pred_fallthru
      _
    // Predicated region
    $region26: #{tpu_custom_call.1} parent=1 // pred_check
      _
    $region27: #{tpu_custom_call.1} parent=1 // pred_check_branch
      %28 = sbr.rel (0) target = $region29
    $region28: #{tpu_custom_call.1} parent=1 // pred_region
      _
    $region29: #{tpu_custom_call.1} parent=1 // pred_fallthru
      _
    // Predicated region
    $region30: #{tpu_custom_call.1} parent=1 // pred_check
      _
    $region31: #{tpu_custom_call.1} parent=1 // pred_check_branch
      %30 = sbr.rel (0) target = $region33
    $region32: #{tpu_custom_call.1} parent=1 // pred_region
      _
    $region33: #{tpu_custom_call.1} parent=1 // pred_fallthru
      _
    // Predicated region
    $region34: #{tpu_custom_call.1} parent=1 // pred_check
      _
    $region35: #{tpu_custom_call.1} parent=1 // pred_check_branch
      %32 = sbr.rel (0) target = $region37
    $region36: #{tpu_custom_call.1} parent=1 // pred_region
      _
    $region37: #{tpu_custom_call.1} parent=1 // pred_fallthru
      _
    %p33 = scmp.eq.s32.totalorder 0, 0
    // Predicated region
    $region38: #{tpu_custom_call.1} parent=1 // pred_check
      %p34 = pneg %p33
    $region39: #{tpu_custom_call.1} parent=1 // pred_check_branch
      %36 = sbr.rel (%p34) target = $region41
    $region40: #{tpu_custom_call.1} parent=1 // pred_region
      %v37 = vld [vmem:[%s0] sm:$0xff]
      %v38 = vld [vmem:[%s0 + $0x8] sm:$0xff]
      %v39 = vld [vmem:[%s0 + $0x10] sm:$0xff]
      %v40 = vld [vmem:[%s0 + $0x18] sm:$0xff]
      %v41 = vld [vmem:[%s0 + $0x20] sm:$0xff]
      %v42 = vld [vmem:[%s0 + $0x28] sm:$0xff]
      %v43 = vld [vmem:[%s0 + $0x30] sm:$0xff]
      %v44 = vld [vmem:[%s0 + $0x38] sm:$0xff]
      %v45 = vld [vmem:[%s0 + $0x40] sm:$0xff]
      %v46 = vld [vmem:[%s0 + $0x48] sm:$0xff]
      %v47 = vld [vmem:[%s0 + $0x50] sm:$0xff]
      %v48 = vld [vmem:[%s0 + $0x58] sm:$0xff]
      %v49 = vld [vmem:[%s0 + $0x60] sm:$0xff]
      %v50 = vld [vmem:[%s0 + $0x68] sm:$0xff]
      %v51 = vld [vmem:[%s0 + $0x70] sm:$0xff]
      %v52 = vld [vmem:[%s0 + $0x78] sm:$0xff]
      %vm53 = vcmask 130048
      %v54 = vsel %vm53, %v37, 0.0
      %55 = vadd.xlane.f32.xlu0 %v54
      %v56 = vpop.xlane.xlu0 %55
      %v57 = vsel %vm53, %v38, 0.0
      %58 = vadd.xlane.f32.xlu0 %v57
      %v59 = vpop.xlane.xlu0 %58
      %v60 = vsel %vm53, %v39, 0.0
      %61 = vadd.xlane.f32.xlu0 %v60
      %v62 = vpop.xlane.xlu0 %61
      %v63 = vsel %vm53, %v40, 0.0
      %64 = vadd.xlane.f32.xlu0 %v63
      %v65 = vpop.xlane.xlu0 %64
      %v66 = vsel %vm53, %v41, 0.0
      %67 = vadd.xlane.f32.xlu0 %v66
      %v68 = vpop.xlane.xlu0 %67
      %v69 = vsel %vm53, %v42, 0.0
      %70 = vadd.xlane.f32.xlu0 %v69
      %v71 = vpop.xlane.xlu0 %70
      %v72 = vsel %vm53, %v43, 0.0
      %73 = vadd.xlane.f32.xlu0 %v72
      %v74 = vpop.xlane.xlu0 %73
      %v75 = vsel %vm53, %v44, 0.0
      %76 = vadd.xlane.f32.xlu0 %v75
      %v77 = vpop.xlane.xlu0 %76
      %v78 = vsel %vm53, %v45, 0.0
      %79 = vadd.xlane.f32.xlu0 %v78
      %v80 = vpop.xlane.xlu0 %79
      %v81 = vsel %vm53, %v46, 0.0
      %82 = vadd.xlane.f32.xlu0 %v81
      %v83 = vpop.xlane.xlu0 %82
      %v84 = vsel %vm53, %v47, 0.0
      %85 = vadd.xlane.f32.xlu0 %v84
      %v86 = vpop.xlane.xlu0 %85
      %v87 = vsel %vm53, %v48, 0.0
      %88 = vadd.xlane.f32.xlu0 %v87
      %v89 = vpop.xlane.xlu0 %88
      %v90 = vsel %vm53, %v49, 0.0
      %91 = vadd.xlane.f32.xlu0 %v90
      %v92 = vpop.xlane.xlu0 %91
      %v93 = vsel %vm53, %v50, 0.0
      %94 = vadd.xlane.f32.xlu0 %v93
      %v95 = vpop.xlane.xlu0 %94
      %v96 = vsel %vm53, %v51, 0.0
      %97 = vadd.xlane.f32.xlu0 %v96
      %v98 = vpop.xlane.xlu0 %97
      %v99 = vsel %vm53, %v52, 0.0
      %100 = vadd.xlane.f32.xlu0 %v99
      %v101 = vpop.xlane.xlu0 %100
      %v102 = vmul.f32 %v56, 0.0625
      %v103 = vmul.f32 %v59, 0.0625
      %v104 = vmul.f32 %v62, 0.0625
      %v105 = vmul.f32 %v65, 0.0625
      %v106 = vmul.f32 %v68, 0.0625
      %v107 = vmul.f32 %v71, 0.0625
      %v108 = vmul.f32 %v74, 0.0625
      %v109 = vmul.f32 %v77, 0.0625
      %v110 = vmul.f32 %v80, 0.0625
      %v111 = vmul.f32 %v83, 0.0625
      %v112 = vmul.f32 %v86, 0.0625
      %v113 = vmul.f32 %v89, 0.0625
      %v114 = vmul.f32 %v92, 0.0625
      %v115 = vmul.f32 %v95, 0.0625
      %v116 = vmul.f32 %v98, 0.0625
      %v117 = vmul.f32 %v101, 0.0625
      %v118 = vld [vmem:[%s1] sm:$0xff]
      %v119 = vld [vmem:[%s1 + $0x8] sm:$0xff]
      %v120 = vld [vmem:[%s1 + $0x10] sm:$0xff]
      %v121 = vld [vmem:[%s1 + $0x18] sm:$0xff]
      %v122 = vld [vmem:[%s2] sm:$0x1]
      %v124 = vlaneseq
      %v125 = vshrl.u32 %v124, 7
      %v126 = vsub.s32 0, %v125
      %v127 = vrot.slane %v122, %v126
      %v145 = vlaneseq
      %v146 = vand.u32 %v145, 127
      %v147 = vlaneseq
      %v148 = vshrl.u32 %v147, 7
      %v149 = vsub.s32 %v146, %v148
      %v150 = vrot.slane %v102, %v149
      %v151 = vadd.s32 %v146, 4294967288
      %v152 = vlaneseq
      %v153 = vshrl.u32 %v152, 7
      %v154 = vsub.s32 %v151, %v153
      %v155 = vrot.slane %v103, %v154
      %vm156 = vcmask 130112
      %v157 = vsel %vm156, %v155, %v150
      %v158 = vadd.s32 %v146, 4294967280
      %v159 = vlaneseq
      %v160 = vshrl.u32 %v159, 7
      %v161 = vsub.s32 %v158, %v160
      %v162 = vrot.slane %v104, %v161
      %vm163 = vcmask 195712
      %v164 = vsel %vm163, %v162, %v157
      %v165 = vadd.s32 %v146, 4294967272
      %v166 = vlaneseq
      %v167 = vshrl.u32 %v166, 7
      %v168 = vsub.s32 %v165, %v167
      %v169 = vrot.slane %v105, %v168
      %vm170 = vcmask 261312
      %v171 = vsel %vm170, %v169, %v164
      %v172 = vlaneseq
      %v173 = vshrl.u32 %v172, 7
      %v174 = vsub.s32 %v146, %v173
      %v175 = vrot.slane %v106, %v174
      %v176 = vlaneseq
      %v177 = vshrl.u32 %v176, 7
      %v178 = vsub.s32 %v151, %v177
      %v179 = vrot.slane %v107, %v178
      %v180 = vsel %vm156, %v179, %v175
      %v181 = vlaneseq
      %v182 = vshrl.u32 %v181, 7
      %v183 = vsub.s32 %v158, %v182
      %v184 = vrot.slane %v108, %v183
      %v185 = vsel %vm163, %v184, %v180
      %v186 = vlaneseq
      %v187 = vshrl.u32 %v186, 7
      %v188 = vsub.s32 %v165, %v187
      %v189 = vrot.slane %v109, %v188
      %v190 = vsel %vm170, %v189, %v185
      %v191 = vlaneseq
      %v192 = vshrl.u32 %v191, 7
      %v193 = vsub.s32 %v146, %v192
      %v194 = vrot.slane %v110, %v193
      %v195 = vlaneseq
      %v196 = vshrl.u32 %v195, 7
      %v197 = vsub.s32 %v151, %v196
      %v198 = vrot.slane %v111, %v197
      %v199 = vsel %vm156, %v198, %v194
      %v200 = vlaneseq
      %v201 = vshrl.u32 %v200, 7
      %v202 = vsub.s32 %v158, %v201
      %v203 = vrot.slane %v112, %v202
      %v204 = vsel %vm163, %v203, %v199
      %v205 = vlaneseq
      %v206 = vshrl.u32 %v205, 7
      %v207 = vsub.s32 %v165, %v206
      %v208 = vrot.slane %v113, %v207
      %v209 = vsel %vm170, %v208, %v204
      %v210 = vlaneseq
      %v211 = vshrl.u32 %v210, 7
      %v212 = vsub.s32 %v146, %v211
      %v213 = vrot.slane %v114, %v212
      %v214 = vlaneseq
      %v215 = vshrl.u32 %v214, 7
      %v216 = vsub.s32 %v151, %v215
      %v217 = vrot.slane %v115, %v216
      %v218 = vsel %vm156, %v217, %v213
      %v219 = vlaneseq
      %v220 = vshrl.u32 %v219, 7
      %v221 = vsub.s32 %v158, %v220
      %v222 = vrot.slane %v116, %v221
      %v223 = vsel %vm163, %v222, %v218
      %v224 = vlaneseq
      %v225 = vshrl.u32 %v224, 7
      %v226 = vsub.s32 %v165, %v225
      %v227 = vrot.slane %v117, %v226
      %v228 = vsel %vm170, %v227, %v223
      %vm229 = vcmask 1041409
      %v230 = vsel %vm229, %v190, %v171
      %vm231 = vcmask 1042434
      %v232 = vsel %vm231, %v209, %v230
      %vm233 = vcmask 1043459
      %v234 = vsel %vm233, %v228, %v232
      %vm235 = vcmask 261120
      %v236 = vsel %vm235, %v234, 0
      %238 = vmatprep.subr.mxu0 0.0
      %239 = vmatpush1.msra.mxu0 %v118
      %240 = vmatprep.subr.mxu0 0.0
      %241 = vmatpush1.msra.mxu0 %v119
      %242 = vmatprep.subr.mxu0 0.0
      %243 = vmatpush1.msra.mxu0 %v120
      %244 = vmatprep.subr.mxu0 0.0
      %245 = vmatpush1.msra.mxu0 %v121
      %246 = vmatprep.subr.mxu0 0.0
      %247 = vmatpush1.msra.mxu0 0.0
      %248 = vmatprep.subr.mxu0 0.0
      %249 = vmatpush1.msra.mxu0 0.0
      %250 = vmatprep.subr.mxu0 0.0
      %251 = vmatpush1.msra.mxu0 0.0
      %252 = vmatprep.subr.mxu0 0.0
      %253 = vmatpush1.msra.mxu0 0.0
      %254 = vmatprep.subr.mxu0 0.0
      %255 = vmatpush1.msra.mxu0 0.0
      %256 = vmatprep.subr.mxu0 0.0
      %257 = vmatpush1.msra.mxu0 0.0
      %258 = vmatprep.subr.mxu0 0.0
      %259 = vmatpush1.msra.mxu0 0.0
      %260 = vmatprep.subr.mxu0 0.0
      %261 = vmatpush1.msra.mxu0 0.0
      %262 = vmatprep.subr.mxu0 0.0
      %263 = vmatpush1.msra.mxu0 0.0
      %264 = vmatprep.subr.mxu0 0.0
      %265 = vmatpush1.msra.mxu0 0.0
      %266 = vmatprep.subr.mxu0 0.0
      %267 = vmatpush1.msra.mxu0 0.0
      %268 = vmatprep.subr.mxu0 0.0
      %269 = vmatpush1.msra.mxu0 0.0
      %270 = vmatprep.subr.mxu0 0.0
      %271 = vmatpush1.msra.mxu0 0.0
      %272 = vmatprep.subr.mxu0 0.0
      %273 = vmatpush1.msra.mxu0 0.0
      %274 = vmatprep.subr.mxu0 0.0
      %275 = vmatpush1.msra.mxu0 0.0
      %276 = vmatprep.subr.mxu0 0.0
      %277 = vmatpush1.msra.mxu0 0.0
      %278 = vmatprep.subr.mxu0 0.0
      %279 = vmatpush1.msra.mxu0 0.0
      %280 = vmatprep.subr.mxu0 0.0
      %281 = vmatpush1.msra.mxu0 0.0
      %282 = vmatprep.subr.mxu0 0.0
      %283 = vmatpush1.msra.mxu0 0.0
      %284 = vmatprep.subr.mxu0 0.0
      %285 = vmatpush1.msra.mxu0 0.0
      %286 = vmatprep.subr.mxu0 0.0
      %287 = vmatpush1.msra.mxu0 0.0
      %288 = vmatprep.subr.mxu0 0.0
      %289 = vmatpush1.msra.mxu0 0.0
      %290 = vmatprep.subr.mxu0 0.0
      %291 = vmatpush1.msra.mxu0 0.0
      %292 = vmatprep.subr.mxu0 0.0
      %293 = vmatpush1.msra.mxu0 0.0
      %294 = vmatprep.subr.mxu0 0.0
      %295 = vmatpush1.msra.mxu0 0.0
      %296 = vmatprep.subr.mxu0 0.0
      %297 = vmatpush1.msra.mxu0 0.0
      %298 = vmatprep.subr.mxu0 0.0
      %299 = vmatpush1.msra.mxu0 0.0
      %300 = vmatprep.subr.mxu0 0.0
      %301 = vmatpush1.msra.mxu0 0.0
      %302 = vmatprep.mubr.f32.mxu0 0.0
      %303 = vmatmul.mubr.f32.gmra.mrb[0].mxu0 %v236
      %v304 = vpop.f32.mrb[0].mxu0
      %v305 = vadd.f32 %v127, %v304
      %v306 = vpop.f32.mrb[0].mxu0
      %307 = vdwg.mxu0
      %v308 = vmax.f32 %v305, 0.0
      %v309 = vmin.f32 %v308, 6.0
      %v310 = vld [vmem:[%s3] sm:$0xff]
      %v311 = vld [vmem:[%s3 + $0x8] sm:$0xff]
      %v312 = vld [vmem:[%s3 + $0x10] sm:$0xff]
      %v313 = vld [vmem:[%s3 + $0x18] sm:$0xff]
      %v314 = vld [vmem:[%s3 + $0x20] sm:$0xff]
      %v315 = vld [vmem:[%s3 + $0x28] sm:$0xff]
      %v316 = vld [vmem:[%s3 + $0x30] sm:$0xff]
      %v317 = vld [vmem:[%s3 + $0x38] sm:$0xff]
      %v318 = vld [vmem:[%s4] sm:$0x1]
      %v320 = vlaneseq
      %v321 = vshrl.u32 %v320, 7
      %v322 = vsub.s32 0, %v321
      %v323 = vrot.slane %v318, %v322
      %vm325 = vcmask 523264
      %v327 = vsel %vm325, %v309, 0
      %329 = vmatprep.subr.mxu0 0.0
      %330 = vmatpush1.msra.mxu0 %v310
      %331 = vmatprep.subr.mxu0 0.0
      %332 = vmatpush1.msra.mxu0 %v311
      %333 = vmatprep.subr.mxu0 0.0
      %334 = vmatpush1.msra.mxu0 %v312
      %335 = vmatprep.subr.mxu0 0.0
      %336 = vmatpush1.msra.mxu0 %v313
      %337 = vmatprep.subr.mxu0 0.0
      %338 = vmatpush1.msra.mxu0 %v314
      %339 = vmatprep.subr.mxu0 0.0
      %340 = vmatpush1.msra.mxu0 %v315
      %341 = vmatprep.subr.mxu0 0.0
      %342 = vmatpush1.msra.mxu0 %v316
      %343 = vmatprep.subr.mxu0 0.0
      %344 = vmatpush1.msra.mxu0 %v317
      %345 = vmatprep.subr.mxu0 0.0
      %346 = vmatpush1.msra.mxu0 0.0
      %347 = vmatprep.subr.mxu0 0.0
      %348 = vmatpush1.msra.mxu0 0.0
      %349 = vmatprep.subr.mxu0 0.0
      %350 = vmatpush1.msra.mxu0 0.0
      %351 = vmatprep.subr.mxu0 0.0
      %352 = vmatpush1.msra.mxu0 0.0
      %353 = vmatprep.subr.mxu0 0.0
      %354 = vmatpush1.msra.mxu0 0.0
      %355 = vmatprep.subr.mxu0 0.0
      %356 = vmatpush1.msra.mxu0 0.0
      %357 = vmatprep.subr.mxu0 0.0
      %358 = vmatpush1.msra.mxu0 0.0
      %359 = vmatprep.subr.mxu0 0.0
      %360 = vmatpush1.msra.mxu0 0.0
      %361 = vmatprep.subr.mxu0 0.0
      %362 = vmatpush1.msra.mxu0 0.0
      %363 = vmatprep.subr.mxu0 0.0
      %364 = vmatpush1.msra.mxu0 0.0
      %365 = vmatprep.subr.mxu0 0.0
      %366 = vmatpush1.msra.mxu0 0.0
      %367 = vmatprep.subr.mxu0 0.0
      %368 = vmatpush1.msra.mxu0 0.0
      %369 = vmatprep.subr.mxu0 0.0
      %370 = vmatpush1.msra.mxu0 0.0
      %371 = vmatprep.subr.mxu0 0.0
      %372 = vmatpush1.msra.mxu0 0.0
      %373 = vmatprep.subr.mxu0 0.0
      %374 = vmatpush1.msra.mxu0 0.0
      %375 = vmatprep.subr.mxu0 0.0
      %376 = vmatpush1.msra.mxu0 0.0
      %377 = vmatprep.subr.mxu0 0.0
      %378 = vmatpush1.msra.mxu0 0.0
      %379 = vmatprep.subr.mxu0 0.0
      %380 = vmatpush1.msra.mxu0 0.0
      %381 = vmatprep.subr.mxu0 0.0
      %382 = vmatpush1.msra.mxu0 0.0
      %383 = vmatprep.subr.mxu0 0.0
      %384 = vmatpush1.msra.mxu0 0.0
      %385 = vmatprep.subr.mxu0 0.0
      %386 = vmatpush1.msra.mxu0 0.0
      %387 = vmatprep.subr.mxu0 0.0
      %388 = vmatpush1.msra.mxu0 0.0
      %389 = vmatprep.subr.mxu0 0.0
      %390 = vmatpush1.msra.mxu0 0.0
      %391 = vmatprep.subr.mxu0 0.0
      %392 = vmatpush1.msra.mxu0 0.0
      %393 = vmatprep.mubr.f32.mxu0 0.0
      %394 = vmatmul.mubr.f32.gmra.mrb[0].mxu0 %v327
      %v395 = vpop.f32.mrb[0].mxu0
      %v396 = vadd.f32 %v323, %v395
      %v397 = vpop.f32.mrb[0].mxu0
      %398 = vdwg.mxu0
      %v399 = vmax.f32 %v396, 0.0
      %v400 = vmin.f32 %v399, 6.0
      %v401 = vld [vmem:[%s5] sm:$0xff]
      %v402 = vld [vmem:[%s5 + $0x8] sm:$0xff]
      %v403 = vld [vmem:[%s5 + $0x10] sm:$0xff]
      %v404 = vld [vmem:[%s5 + $0x18] sm:$0xff]
      %v405 = vld [vmem:[%s6] sm:$0x1]
      %v407 = vlaneseq
      %v408 = vshrl.u32 %v407, 7
      %v409 = vsub.s32 0, %v408
      %v410 = vrot.slane %v405, %v409
      %v413 = vsel %vm235, %v400, 0
      %415 = vmatprep.subr.mxu0 0.0
      %416 = vmatpush1.msra.mxu0 %v401
      %417 = vmatprep.subr.mxu0 0.0
      %418 = vmatpush1.msra.mxu0 %v402
      %419 = vmatprep.subr.mxu0 0.0
      %420 = vmatpush1.msra.mxu0 %v403
      %421 = vmatprep.subr.mxu0 0.0
      %422 = vmatpush1.msra.mxu0 %v404
      %423 = vmatprep.subr.mxu0 0.0
      %424 = vmatpush1.msra.mxu0 0.0
      %425 = vmatprep.subr.mxu0 0.0
      %426 = vmatpush1.msra.mxu0 0.0
      %427 = vmatprep.subr.mxu0 0.0
      %428 = vmatpush1.msra.mxu0 0.0
      %429 = vmatprep.subr.mxu0 0.0
      %430 = vmatpush1.msra.mxu0 0.0
      %431 = vmatprep.subr.mxu0 0.0
      %432 = vmatpush1.msra.mxu0 0.0
      %433 = vmatprep.subr.mxu0 0.0
      %434 = vmatpush1.msra.mxu0 0.0
      %435 = vmatprep.subr.mxu0 0.0
      %436 = vmatpush1.msra.mxu0 0.0
      %437 = vmatprep.subr.mxu0 0.0
      %438 = vmatpush1.msra.mxu0 0.0
      %439 = vmatprep.subr.mxu0 0.0
      %440 = vmatpush1.msra.mxu0 0.0
      %441 = vmatprep.subr.mxu0 0.0
      %442 = vmatpush1.msra.mxu0 0.0
      %443 = vmatprep.subr.mxu0 0.0
      %444 = vmatpush1.msra.mxu0 0.0
      %445 = vmatprep.subr.mxu0 0.0
      %446 = vmatpush1.msra.mxu0 0.0
      %447 = vmatprep.subr.mxu0 0.0
      %448 = vmatpush1.msra.mxu0 0.0
      %449 = vmatprep.subr.mxu0 0.0
      %450 = vmatpush1.msra.mxu0 0.0
      %451 = vmatprep.subr.mxu0 0.0
      %452 = vmatpush1.msra.mxu0 0.0
      %453 = vmatprep.subr.mxu0 0.0
      %454 = vmatpush1.msra.mxu0 0.0
      %455 = vmatprep.subr.mxu0 0.0
      %456 = vmatpush1.msra.mxu0 0.0
      %457 = vmatprep.subr.mxu0 0.0
      %458 = vmatpush1.msra.mxu0 0.0
      %459 = vmatprep.subr.mxu0 0.0
      %460 = vmatpush1.msra.mxu0 0.0
      %461 = vmatprep.subr.mxu0 0.0
      %462 = vmatpush1.msra.mxu0 0.0
      %463 = vmatprep.subr.mxu0 0.0
      %464 = vmatpush1.msra.mxu0 0.0
      %465 = vmatprep.subr.mxu0 0.0
      %466 = vmatpush1.msra.mxu0 0.0
      %467 = vmatprep.subr.mxu0 0.0
      %468 = vmatpush1.msra.mxu0 0.0
      %469 = vmatprep.subr.mxu0 0.0
      %470 = vmatpush1.msra.mxu0 0.0
      %471 = vmatprep.subr.mxu0 0.0
      %472 = vmatpush1.msra.mxu0 0.0
      %473 = vmatprep.subr.mxu0 0.0
      %474 = vmatpush1.msra.mxu0 0.0
      %475 = vmatprep.subr.mxu0 0.0
      %476 = vmatpush1.msra.mxu0 0.0
      %477 = vmatprep.subr.mxu0 0.0
      %478 = vmatpush1.msra.mxu0 0.0
      %479 = vmatprep.mubr.f32.mxu0 0.0
      %480 = vmatmul.mubr.f32.gmra.mrb[0].mxu0 %v413
      %v481 = vpop.f32.mrb[0].mxu0
      %v482 = vadd.f32 %v410, %v481
      %v483 = vpop.f32.mrb[0].mxu0
      %484 = vdwg.mxu0
      %v485 = vmax.f32 %v482, 0.0
      %v486 = vmin.f32 %v485, 6.0
      %v487 = vld [vmem:[%s7] sm:$0xff]
      %v488 = vld [vmem:[%s7 + $0x8] sm:$0xff]
      %v489 = vld [vmem:[%s8] sm:$0x1]
      %v491 = vlaneseq
      %v492 = vshrl.u32 %v491, 7
      %v493 = vsub.s32 0, %v492
      %v494 = vrot.slane %v489, %v493
      %v497 = vsel %vm53, %v486, 0
      %499 = vmatprep.subr.mxu0 0.0
      %500 = vmatpush1.msra.mxu0 %v487
      %501 = vmatprep.subr.mxu0 0.0
      %502 = vmatpush1.msra.mxu0 %v488
      %503 = vmatprep.subr.mxu0 0.0
      %504 = vmatpush1.msra.mxu0 0.0
      %505 = vmatprep.subr.mxu0 0.0
      %506 = vmatpush1.msra.mxu0 0.0
      %507 = vmatprep.subr.mxu0 0.0
      %508 = vmatpush1.msra.mxu0 0.0
      %509 = vmatprep.subr.mxu0 0.0
      %510 = vmatpush1.msra.mxu0 0.0
      %511 = vmatprep.subr.mxu0 0.0
      %512 = vmatpush1.msra.mxu0 0.0
      %513 = vmatprep.subr.mxu0 0.0
      %514 = vmatpush1.msra.mxu0 0.0
      %515 = vmatprep.subr.mxu0 0.0
      %516 = vmatpush1.msra.mxu0 0.0
      %517 = vmatprep.subr.mxu0 0.0
      %518 = vmatpush1.msra.mxu0 0.0
      %519 = vmatprep.subr.mxu0 0.0
      %520 = vmatpush1.msra.mxu0 0.0
      %521 = vmatprep.subr.mxu0 0.0
      %522 = vmatpush1.msra.mxu0 0.0
      %523 = vmatprep.subr.mxu0 0.0
      %524 = vmatpush1.msra.mxu0 0.0
      %525 = vmatprep.subr.mxu0 0.0
      %526 = vmatpush1.msra.mxu0 0.0
      %527 = vmatprep.subr.mxu0 0.0
      %528 = vmatpush1.msra.mxu0 0.0
      %529 = vmatprep.subr.mxu0 0.0
      %530 = vmatpush1.msra.mxu0 0.0
      %531 = vmatprep.subr.mxu0 0.0
      %532 = vmatpush1.msra.mxu0 0.0
      %533 = vmatprep.subr.mxu0 0.0
      %534 = vmatpush1.msra.mxu0 0.0
      %535 = vmatprep.subr.mxu0 0.0
      %536 = vmatpush1.msra.mxu0 0.0
      %537 = vmatprep.subr.mxu0 0.0
      %538 = vmatpush1.msra.mxu0 0.0
      %539 = vmatprep.subr.mxu0 0.0
      %540 = vmatpush1.msra.mxu0 0.0
      %541 = vmatprep.subr.mxu0 0.0
      %542 = vmatpush1.msra.mxu0 0.0
      %543 = vmatprep.subr.mxu0 0.0
      %544 = vmatpush1.msra.mxu0 0.0
      %545 = vmatprep.subr.mxu0 0.0
      %546 = vmatpush1.msra.mxu0 0.0
      %547 = vmatprep.subr.mxu0 0.0
      %548 = vmatpush1.msra.mxu0 0.0
      %549 = vmatprep.subr.mxu0 0.0
      %550 = vmatpush1.msra.mxu0 0.0
      %551 = vmatprep.subr.mxu0 0.0
      %552 = vmatpush1.msra.mxu0 0.0
      %553 = vmatprep.subr.mxu0 0.0
      %554 = vmatpush1.msra.mxu0 0.0
      %555 = vmatprep.subr.mxu0 0.0
      %556 = vmatpush1.msra.mxu0 0.0
      %557 = vmatprep.subr.mxu0 0.0
      %558 = vmatpush1.msra.mxu0 0.0
      %559 = vmatprep.subr.mxu0 0.0
      %560 = vmatpush1.msra.mxu0 0.0
      %561 = vmatprep.subr.mxu0 0.0
      %562 = vmatpush1.msra.mxu0 0.0
      %563 = vmatprep.mubr.f32.mxu0 0.0
      %564 = vmatmul.mubr.f32.gmra.mrb[0].mxu0 %v497
      %v565 = vpop.f32.mrb[0].mxu0
      %v566 = vadd.f32 %v494, %v565
      %v567 = vpop.f32.mrb[0].mxu0
      %568 = vdwg.mxu0
      %vm569 = vcmp.lt.s32.totalorder %v146, 8
      %v570 = vsel %vm569, %v566, -1e+30
      %vm571 = vcmask 1043456
      %v572 = vsel %vm571, %v570, -inf
      %573 = vmax.xlane.f32.xlu0 %v572
      %v574 = vpop.xlane.xlu0 %573
      %v575 = vsub.f32 %v570, %v574
      %v576 = vmul.f32 %v575, 1.442695
      %v577 = vpow.pop %v576
      %v578 = vsel %vm571, %v577, 0.0
      %579 = vadd.xlane.f32.xlu0 %v578
      %v580 = vpop.xlane.xlu0 %579
      %v581 = vrcp.pop %v580
      %v582 = vmul.f32 %v577, %v581
      %583 = vst [vmem:[#allocation3] sm:$0xf] %v582
    $region41: #{tpu_custom_call.1} parent=1 // pred_fallthru
      _
    // Predicated region
    $region42: #{tpu_custom_call.1} parent=1 // pred_check
      _
    $region43: #{tpu_custom_call.1} parent=1 // pred_check_branch
      %585 = sbr.rel (0) target = $region45
    $region44: #{tpu_custom_call.1} parent=1 // pred_region
      %s587 = ssub.s32 64, 64
      %588 = vsyncadd [#allocation4], %s587
      %s590 = sshll.u32 [#allocation3], 4
      %s591 = int_to_ptr.vmem [resolvable:$true] %s590
      %593 = dma.vmem_to_hbm [thread:$0]  %s591, 64, %s9, [#allocation4]
    $region45: #{tpu_custom_call.1} parent=1 // pred_fallthru
      _
    // Predicated region
    $region46: #{tpu_custom_call.1} parent=1 // pred_check
      _
    $region47: #{tpu_custom_call.1} parent=1 // pred_check_branch
      %595 = sbr.rel (0) target = $region49
    $region48: #{tpu_custom_call.1} parent=1 // pred_region
      %596 = dma.done [#allocation4], 64
    $region49: #{tpu_custom_call.1} parent=1 // pred_fallthru
      _
    %597 = vsyncpa [#allocation4], 1

</llo_original>
